<compile_context>
chip_gen: v7x
topology: tpu7x:2x2x1
jax: 0.10.0
libtpu: 0.0.40
codegen_flags: <defaults>
</compile_context>

<pallas_src>
import functools

import jax
import jax.numpy as jnp
from jax.experimental import pallas as pl
from jax.experimental.pallas import tpu as pltpu


def _dice_sums_kernel(logits_ref, target_ref, inter_ref, union_ref):
    """Accumulate vreg-shaped inter / union partial sums over spatial tiles.

    logits_ref: (1, C, S, 128)   native dtype, one batch elem / spatial tile
    target_ref: (1, 1, S, 128)   integer class ids (pad pixels hold id C)
    inter_ref / union_ref: (1, 1, C, R, 128) f32 accumulators (R = 8 normally),
        VMEM-resident across the trailing (arbitrary) spatial grid axis.
    """
    t = pl.program_id(2)

    @pl.when(t == 0)
    def _():
        inter_ref[...] = jnp.zeros_like(inter_ref)
        union_ref[...] = jnp.zeros_like(union_ref)

    x = logits_ref[0].astype(jnp.float32)                      # (C, S, 128)
    C, S, L = x.shape
    acc_rows = inter_ref.shape[3]
    n_grp = S // acc_rows

    # Channel softmax: C is a major axis -> plain VPU vreg-wise max / sum.
    m = jnp.max(x, axis=0, keepdims=True)                      # (1, S, 128)
    e = jnp.exp(x - m)                                         # EUP
    denom = jnp.sum(e, axis=0, keepdims=True)                  # (1, S, 128)
    pred = e * pl.reciprocal(denom, approx=True)               # divide stays on EUP

    tgt = target_ref[0].astype(jnp.int32)                      # (1, S, 128)
    cls = jax.lax.broadcasted_iota(jnp.int32, (C, S, L), 0)    # (C, S, 128)
    match = tgt == cls                                         # on-the-fly one-hot
    one_hot = match.astype(jnp.float32)

    # Keep the accumulators vreg-shaped: reduce only the row-group axis
    # (whole-vreg VPU adds); the final R x 128 reduction runs in the epilogue.
    def tile_sum(v):                                           # (C, S, 128) -> (C, R, 128)
        return v.reshape(C, n_grp, acc_rows, L).sum(axis=1)

    inter_ref[...] += tile_sum(jnp.where(match, pred, 0.0))[None, None]
    union_ref[...] += tile_sum(pred + one_hot)[None, None]


def _choose_rows_per_tile(rows, C, logits_itemsize, target_itemsize,
                          target_step_bytes, vmem_temp_budget_bytes):
    """Pick rows-per-spatial-tile (static).  Returns (sub, rows_padded)."""
    # Sub-32-bit dtypes pack along sublanes -> keep the sublane-block axis of
    # every multi-tile block aligned to the packed tile height.
    align = max(8, 32 // logits_itemsize, 32 // target_itemsize)
    in_row_bytes = 128 * (C * logits_itemsize + target_itemsize)           # HBM / step
    vmem_row_bytes = 128 * (2 * (C * logits_itemsize + target_itemsize)    # dbl-buffered in
                            + 8 * C * 4)                                   # ~f32 temporaries
    cap = max(align, (vmem_temp_budget_bytes // vmem_row_bytes) // align * align)
    target = max(align, min(target_step_bytes // in_row_bytes, cap) // align * align)

    if rows <= cap and rows * in_row_bytes <= 2 * target_step_bytes:
        return rows, rows                    # single full-extent tile, no alignment/pad
    # Prefer an aligned divisor of `rows`: no padding, no closed-form correction.
    d = min(target, (rows // align) * align)
    while d >= align and rows % d != 0:
        d -= align
    if d >= align and d * in_row_bytes >= min(target_step_bytes // 4, 256 << 10):
        return d, rows
    # Fall back to zero-padding `rows` up to a multiple of the target tile.
    sub = target
    return sub, pl.cdiv(rows, sub) * sub


@functools.partial(jax.jit, static_argnames=("smooth", "target_step_bytes"))
def dice_loss(logits, target, class_weights, smooth=1e-5,
              target_step_bytes=2 * 1024 * 1024):
    """Dice loss matching PyTorch DiceLoss.forward (multi-class softmax branch).

    logits: (N, C, H, W), C > 1, any float dtype (bf16 recommended for training)
    target: (N, 1, H, W) integer class indices in [0, C)
    class_weights: (1, C) float32
    """
    N, C, H, W = logits.shape
    assert C > 1, "only the multi-class softmax branch is implemented"
    HW = H * W
    rows = pl.cdiv(HW, 128)

    if not jnp.issubdtype(target.dtype, jnp.integer):
        target = target.astype(jnp.int32)
    if target.dtype.itemsize == 1 and C > 126:   # pad id C must fit the dtype
        target = target.astype(jnp.int32)

    logits_itemsize = logits.dtype.itemsize
    target_itemsize = target.dtype.itemsize

    vmem_temp_budget = 40 * 1024 * 1024   # keeps tiles inside v7x's 64 MiB physical VMEM
    sub, rows_padded = _choose_rows_per_tile(
        rows, C, logits_itemsize, target_itemsize, target_step_bytes, vmem_temp_budget)
    n_tiles = rows_padded // sub
    hw_padded = rows_padded * 128
    n_pad = hw_padded - HW

    logits_flat = logits.reshape(N, C, HW)     # free row-major view, native dtype
    target_flat = target.reshape(N, 1, HW)
    if n_pad:
        # Pad pixels: zero logits -> exactly uniform softmax (mass removed in the
        # epilogue); target padded with the out-of-range class C -> one-hot and
        # inter contributions are exactly zero.
        logits_flat = jnp.pad(logits_flat, ((0, 0), (0, 0), (0, n_pad)))
        target_flat = jnp.pad(target_flat, ((0, 0), (0, 0), (0, n_pad)),
                              constant_values=C)

    logits_4d = logits_flat.reshape(N, C, rows_padded, 128)
    target_4d = target_flat.reshape(N, 1, rows_padded, 128)

    # 2-way spatial split as a second parallel axis when N is small (v7x megacore).
    n_splits = 2 if (N < 4 and n_tiles >= 2 and n_tiles % 2 == 0) else 1
    tiles_per_split = n_tiles // n_splits
    acc_rows = 8 if sub % 8 == 0 else sub

    inter_blk, union_blk = pl.pallas_call(
        _dice_sums_kernel,
        out_shape=(
            jax.ShapeDtypeStruct((N, n_splits, C, acc_rows, 128), jnp.float32),
            jax.ShapeDtypeStruct((N, n_splits, C, acc_rows, 128), jnp.float32),
        ),
        grid=(N, n_splits, tiles_per_split),
        in_specs=[
            pl.BlockSpec((1, C, sub, 128),
                         lambda n, h, t: (n, 0, h * tiles_per_split + t, 0)),
            pl.BlockSpec((1, 1, sub, 128),
                         lambda n, h, t: (n, 0, h * tiles_per_split + t, 0)),
        ],
        out_specs=(
            pl.BlockSpec((1, 1, C, acc_rows, 128), lambda n, h, t: (n, h, 0, 0, 0)),
            pl.BlockSpec((1, 1, C, acc_rows, 128), lambda n, h, t: (n, h, 0, 0, 0)),
        ),
        compiler_params=pltpu.CompilerParams(
            dimension_semantics=("parallel", "parallel", "arbitrary"),
            vmem_limit_bytes=48 * 1024 * 1024),
    )(logits_4d, target_4d)

    # Tiny (N, C)-sized epilogue in plain JAX.
    inter = jnp.sum(inter_blk, axis=(1, 3, 4))                 # (N, C)
    union = jnp.sum(union_blk, axis=(1, 3, 4))                 # (N, C)
    if n_pad:
        union = union - (n_pad / C)   # remove the uniform softmax mass of pad pixels
    dice = (2.0 * inter + smooth) / (union + smooth)           # (N, C)
    weighted_dice = dice * class_weights                       # broadcast (1, C)
    return 1.0 - jnp.mean(weighted_dice)


def _reference_dice_loss(logits, target, class_weights, smooth=1e-5):
    """Pure-JAX reference mirroring the PyTorch code (softmax branch)."""
    N, C, H, W = logits.shape
    pred = jax.nn.softmax(logits.astype(jnp.float32), axis=1)
    one_hot = jax.nn.one_hot(target[:, 0].astype(jnp.int32), C, dtype=jnp.float32)
    one_hot = jnp.transpose(one_hot, (0, 3, 1, 2))             # (N, C, H, W)
    inter = (pred * one_hot).reshape(N, C, -1).sum(axis=2)
    union = (pred + one_hot).reshape(N, C, -1).sum(axis=2)
    dice = (2.0 * inter + smooth) / (union + smooth)
    return 1.0 - jnp.mean(dice * class_weights)


if __name__ == "__main__":
    key = jax.random.PRNGKey(0)
    keys = jax.random.split(key, 8)

    def check(loss, ref, tag):
        # Tolerance covers the ~2e-4 relative error of the approx EUP reciprocal.
        assert jnp.allclose(loss, ref, atol=2e-3, rtol=2e-3), (tag, loss, ref)

    # Case 1: small, 128-aligned H*W, f32 logits (single-tile path).
    N, C, H, W = 2, 4, 16, 16
    logits = jax.random.normal(keys[0], (N, C, H, W), dtype=jnp.float32)
    target = jax.random.randint(keys[1], (N, 1, H, W), 0, C, dtype=jnp.int32)
    cw = jnp.ones((1, C), dtype=jnp.float32)                   # DiceLoss default
    loss = jax.block_until_ready(dice_loss(logits, target, cw))
    check(loss, _reference_dice_loss(logits, target, cw), "case1")

    # Case 2: ragged H*W (pad + closed-form union correction) + non-uniform weights.
    N2, C2, H2, W2 = 2, 3, 10, 13
    logits2 = jax.random.normal(keys[2], (N2, C2, H2, W2), dtype=jnp.float32)
    target2 = jax.random.randint(keys[3], (N2, 1, H2, W2), 0, C2, dtype=jnp.int32)
    cw2 = jnp.array([[0.5, 1.0, 2.0]], dtype=jnp.float32)
    loss2 = jax.block_until_ready(dice_loss(logits2, target2, cw2))
    check(loss2, _reference_dice_loss(logits2, target2, cw2), "case2")

    # Case 3: bf16 logits + int8 target, N=1 -> multi-tile + 2-way parallel split
    # (small target_step_bytes forces multiple tiles at this toy size).
    N3, C3, H3, W3 = 1, 4, 128, 128
    logits3 = jax.random.normal(keys[4], (N3, C3, H3, W3)).astype(jnp.bfloat16)
    target3 = jax.random.randint(keys[5], (N3, 1, H3, W3), 0, C3,
                                 dtype=jnp.int32).astype(jnp.int8)
    cw3 = jnp.ones((1, C3), dtype=jnp.float32)
    loss3 = jax.block_until_ready(
        dice_loss(logits3, target3, cw3, target_step_bytes=40_000))
    check(loss3, _reference_dice_loss(logits3, target3, cw3), "case3")

    # Case 4: f32, several tiles per split (accumulation over the arbitrary axis).
    N4, C4, H4, W4 = 2, 2, 64, 128
    logits4 = jax.random.normal(keys[6], (N4, C4, H4, W4), dtype=jnp.float32)
    target4 = jax.random.randint(keys[7], (N4, 1, H4, W4), 0, C4, dtype=jnp.int32)
    cw4 = jnp.ones((1, C4), dtype=jnp.float32)
    loss4 = jax.block_until_ready(
        dice_loss(logits4, target4, cw4, target_step_bytes=32_768))
    check(loss4, _reference_dice_loss(logits4, target4, cw4), "case4")

    print("KERNEL_OK")
</pallas_src>

<mosaic_0001>
module attributes {stable_mosaic.version = 11 : i64} {
  func.func @_dice_sums_kernel(%arg0: i32, %arg1: i32, %arg2: i32, %arg3: memref<1x4x2x128xf32, #tpu.memory_space<vmem>>, %arg4: memref<1x1x2x128xi32, #tpu.memory_space<vmem>>, %arg5: memref<1x1x4x2x128xf32, #tpu.memory_space<vmem>>, %arg6: memref<1x1x4x2x128xf32, #tpu.memory_space<vmem>>) attributes {dimension_semantics = [#tpu.dimension_semantics<parallel>, #tpu.dimension_semantics<parallel>, #tpu.dimension_semantics<arbitrary>], iteration_bounds = array<i64: 2, 1, 1>, scalar_prefetch = 0 : i64, scratch_operands = 0 : i64, tpu.core_type = #tpu.core_type<tc>, window_params = [{transform_indices = @transform_0, window_bounds = array<i64: 1, 4, 2, 128>}, {transform_indices = @transform_1, window_bounds = array<i64: 1, 1, 2, 128>}, {transform_indices = @transform_2, window_bounds = array<i64: 1, 1, 4, 2, 128>}, {transform_indices = @transform_3, window_bounds = array<i64: 1, 1, 4, 2, 128>}]} {
    %c0_i32 = arith.constant 0 : i32
    %0 = arith.cmpi eq, %arg2, %c0_i32 : i32
    %1 = arith.extui %0 : i1 to i32
    %c0_i32_0 = arith.constant 0 : i32
    %2 = arith.cmpi ne, %1, %c0_i32_0 : i32
    scf.if %2 {
      %cst_32 = arith.constant 0.000000e+00 : f32
      %37 = vector.broadcast %cst_32 : f32 to vector<1x1x4x2x128xf32>
      %c0_33 = arith.constant 0 : index
      %c0_34 = arith.constant 0 : index
      %c0_35 = arith.constant 0 : index
      %c0_36 = arith.constant 0 : index
      %c0_37 = arith.constant 0 : index
      %38 = vector.load %arg5[%c0_33, %c0_34, %c0_35, %c0_36, %c0_37] : memref<1x1x4x2x128xf32, #tpu.memory_space<vmem>>, vector<1x1x4x2x128xf32>
      tpu.vector_store %arg5[%c0_33, %c0_34, %c0_35, %c0_36, %c0_37], %37 {strides = array<i32>} : memref<1x1x4x2x128xf32, #tpu.memory_space<vmem>>, vector<1x1x4x2x128xf32>,
      %cst_38 = arith.constant 0.000000e+00 : f32
      %39 = vector.broadcast %cst_38 : f32 to vector<1x1x4x2x128xf32>
      %c0_39 = arith.constant 0 : index
      %c0_40 = arith.constant 0 : index
      %c0_41 = arith.constant 0 : index
      %c0_42 = arith.constant 0 : index
      %c0_43 = arith.constant 0 : index
      %40 = vector.load %arg6[%c0_39, %c0_40, %c0_41, %c0_42, %c0_43] : memref<1x1x4x2x128xf32, #tpu.memory_space<vmem>>, vector<1x1x4x2x128xf32>
      tpu.vector_store %arg6[%c0_39, %c0_40, %c0_41, %c0_42, %c0_43], %39 {strides = array<i32>} : memref<1x1x4x2x128xf32, #tpu.memory_space<vmem>>, vector<1x1x4x2x128xf32>,
    } else {
    }
    %c0 = arith.constant 0 : index
    %c0_1 = arith.constant 0 : index
    %c0_2 = arith.constant 0 : index
    %c0_3 = arith.constant 0 : index
    %3 = vector.load %arg3[%c0, %c0_1, %c0_2, %c0_3] : memref<1x4x2x128xf32, #tpu.memory_space<vmem>>, vector<1x4x2x128xf32>
    %4 = vector.shape_cast %3 : vector<1x4x2x128xf32> to vector<4x2x128xf32>
    %cst = arith.constant dense<0xFF800000> : vector<2x128xf32>
    %5 = vector.multi_reduction <maximumf>, %4, %cst [0] : vector<4x2x128xf32> to vector<2x128xf32>
    %6 = vector.shape_cast %5 : vector<2x128xf32> to vector<1x2x128xf32>
    %7 = vector.broadcast %6 : vector<1x2x128xf32> to vector<4x2x128xf32>
    %8 = arith.subf %4, %7 : vector<4x2x128xf32>
    %9 = math.exp %8 : vector<4x2x128xf32>
    %cst_4 = arith.constant dense<0.000000e+00> : vector<2x128xf32>
    %10 = vector.multi_reduction <add>, %9, %cst_4 [0] : vector<4x2x128xf32> to vector<2x128xf32>
    %11 = vector.shape_cast %10 : vector<2x128xf32> to vector<1x2x128xf32>
    %12 = tpu.reciprocal %11 {approx = true} : vector<1x2x128xf32> -> vector<1x2x128xf32>
    %13 = vector.broadcast %12 : vector<1x2x128xf32> to vector<4x2x128xf32>
    %14 = arith.mulf %9, %13 : vector<4x2x128xf32>
    %c0_5 = arith.constant 0 : index
    %c0_6 = arith.constant 0 : index
    %c0_7 = arith.constant 0 : index
    %c0_8 = arith.constant 0 : index
    %15 = vector.load %arg4[%c0_5, %c0_6, %c0_7, %c0_8] : memref<1x1x2x128xi32, #tpu.memory_space<vmem>>, vector<1x1x2x128xi32>
    %16 = vector.shape_cast %15 : vector<1x1x2x128xi32> to vector<1x2x128xi32>
    %17 = tpu.iota {dimensions = array<i32: 0>} : vector<4x2x128xi32>
    %18 = vector.broadcast %16 : vector<1x2x128xi32> to vector<4x2x128xi32>
    %19 = arith.cmpi eq, %18, %17 : vector<4x2x128xi32>
    %20 = arith.extui %19 : vector<4x2x128xi1> to vector<4x2x128xi32>
    %21 = arith.sitofp %20 : vector<4x2x128xi32> to vector<4x2x128xf32>
    %c0_9 = arith.constant 0 : index
    %c0_10 = arith.constant 0 : index
    %c0_11 = arith.constant 0 : index
    %c0_12 = arith.constant 0 : index
    %c0_13 = arith.constant 0 : index
    %22 = vector.load %arg5[%c0_9, %c0_10, %c0_11, %c0_12, %c0_13] : memref<1x1x4x2x128xf32, #tpu.memory_space<vmem>>, vector<1x1x4x2x128xf32>
    %cst_14 = arith.constant 0.000000e+00 : f32
    %23 = vector.broadcast %cst_14 : f32 to vector<4x2x128xf32>
    %24 = arith.select %19, %14, %23 : vector<4x2x128xi1>, vector<4x2x128xf32>
    %25 = vector.shape_cast %24 : vector<4x2x128xf32> to vector<4x1x2x128xf32>
    %cst_15 = arith.constant dense<0.000000e+00> : vector<4x2x128xf32>
    %26 = vector.multi_reduction <add>, %25, %cst_15 [1] : vector<4x1x2x128xf32> to vector<4x2x128xf32>
    %27 = vector.shape_cast %26 : vector<4x2x128xf32> to vector<1x1x4x2x128xf32>
    %28 = arith.addf %22, %27 : vector<1x1x4x2x128xf32>
    %c0_16 = arith.constant 0 : index
    %c0_17 = arith.constant 0 : index
    %c0_18 = arith.constant 0 : index
    %c0_19 = arith.constant 0 : index
    %c0_20 = arith.constant 0 : index
    %29 = vector.load %arg5[%c0_16, %c0_17, %c0_18, %c0_19, %c0_20] : memref<1x1x4x2x128xf32, #tpu.memory_space<vmem>>, vector<1x1x4x2x128xf32>
    tpu.vector_store %arg5[%c0_16, %c0_17, %c0_18, %c0_19, %c0_20], %28 {strides = array<i32>} : memref<1x1x4x2x128xf32, #tpu.memory_space<vmem>>, vector<1x1x4x2x128xf32>,
    %c0_21 = arith.constant 0 : index
    %c0_22 = arith.constant 0 : index
    %c0_23 = arith.constant 0 : index
    %c0_24 = arith.constant 0 : index
    %c0_25 = arith.constant 0 : index
    %30 = vector.load %arg6[%c0_21, %c0_22, %c0_23, %c0_24, %c0_25] : memref<1x1x4x2x128xf32, #tpu.memory_space<vmem>>, vector<1x1x4x2x128xf32>
    %31 = arith.addf %14, %21 : vector<4x2x128xf32>
    %32 = vector.shape_cast %31 : vector<4x2x128xf32> to vector<4x1x2x128xf32>
    %cst_26 = arith.constant dense<0.000000e+00> : vector<4x2x128xf32>
    %33 = vector.multi_reduction <add>, %32, %cst_26 [1] : vector<4x1x2x128xf32> to vector<4x2x128xf32>
    %34 = vector.shape_cast %33 : vector<4x2x128xf32> to vector<1x1x4x2x128xf32>
    %35 = arith.addf %30, %34 : vector<1x1x4x2x128xf32>
    %c0_27 = arith.constant 0 : index
    %c0_28 = arith.constant 0 : index
    %c0_29 = arith.constant 0 : index
    %c0_30 = arith.constant 0 : index
    %c0_31 = arith.constant 0 : index
    %36 = vector.load %arg6[%c0_27, %c0_28, %c0_29, %c0_30, %c0_31] : memref<1x1x4x2x128xf32, #tpu.memory_space<vmem>>, vector<1x1x4x2x128xf32>
    tpu.vector_store %arg6[%c0_27, %c0_28, %c0_29, %c0_30, %c0_31], %35 {strides = array<i32>} : memref<1x1x4x2x128xf32, #tpu.memory_space<vmem>>, vector<1x1x4x2x128xf32>,
    return
  }
  func.func @transform_0(%arg0: i32, %arg1: i32, %arg2: i32) -> (i32, i32, i32, i32) {
    %c1_i32 = arith.constant 1 : i32
    %0 = arith.muli %arg1, %c1_i32 : i32
    %1 = arith.addi %0, %arg2 : i32
    %c0_i32 = arith.constant 0 : i32
    %c0_i32_0 = arith.constant 0 : i32
    %c0_i32_1 = arith.constant 0 : i32
    return %arg0, %c0_i32, %1, %c0_i32_0 : i32, i32, i32, i32
  }
  func.func @transform_1(%arg0: i32, %arg1: i32, %arg2: i32) -> (i32, i32, i32, i32) {
    %c1_i32 = arith.constant 1 : i32
    %0 = arith.muli %arg1, %c1_i32 : i32
    %1 = arith.addi %0, %arg2 : i32
    %c0_i32 = arith.constant 0 : i32
    %c0_i32_0 = arith.constant 0 : i32
    %c0_i32_1 = arith.constant 0 : i32
    return %arg0, %c0_i32, %1, %c0_i32_0 : i32, i32, i32, i32
  }
  func.func @transform_2(%arg0: i32, %arg1: i32, %arg2: i32) -> (i32, i32, i32, i32, i32) {
    %c0_i32 = arith.constant 0 : i32
    %c0_i32_0 = arith.constant 0 : i32
    %c0_i32_1 = arith.constant 0 : i32
    %c0_i32_2 = arith.constant 0 : i32
    return %arg0, %arg1, %c0_i32, %c0_i32_0, %c0_i32_1 : i32, i32, i32, i32, i32
  }
  func.func @transform_3(%arg0: i32, %arg1: i32, %arg2: i32) -> (i32, i32, i32, i32, i32) {
    %c0_i32 = arith.constant 0 : i32
    %c0_i32_0 = arith.constant 0 : i32
    %c0_i32_1 = arith.constant 0 : i32
    %c0_i32_2 = arith.constant 0 : i32
    return %arg0, %arg1, %c0_i32, %c0_i32_0, %c0_i32_1 : i32, i32, i32, i32, i32
  }
}

</mosaic_0001>

<llo_original>
// kernel: dice_loss.1
$region0: #{dice_loss.1}
  #allocation0 [shape = 'u32[]', space=smem, size = 0x4, offset = 0x4, fixed_abs, tag = 'smem constant byte address 0x4 - core index']
  #allocation1 [shape = 'u32[144,128]{1,0:T(1,128)}', space=vmem, size = 0x12000, scoped, tag = 'internal scratch']
  %s0 = inlined_call_operand.vmem [shape: f32[2,4,2,128], index: 0, kind: input, shape index: {}]
  %s1 = inlined_call_operand.vmem [shape: s32[2,1,2,128], index: 1, kind: input, shape index: {}]
  %s2 = inlined_call_operand.vmem [shape: f32[2,1,4,2,128], index: 2, kind: output, shape index: {0}]
  %s3 = inlined_call_operand.vmem [shape: f32[2,1,4,2,128], index: 3, kind: output, shape index: {1}]
  %4 = xla_tuple %s2, %s3
  %s5 = sld [smem:[#allocation0]]
  $region53: #{dice_loss.1} parent=0
    _
  %s7 = ssub.s32 1, %s5
  %s8 = scalar_select 0, %s7, %s5
  loop: start=0, step=1, limit=4
  $region2: #{dice_loss.1} parent=0 // loop_pre_header
    _
  $region3: #{dice_loss.1} parent=0 // loop_header
    %s10 = sphi 0, %s14
    %p11 = scmp.ge.s32.totalorder %s10, 4
    %s17 = sphi 0, %s36
    %s18 = sphi 0, %s32
    %s19 = sphi 0, %s28
    %s20 = sphi 0, %s17
    %s21 = sphi 0, %s18
    %s22 = sphi 0, %s19
    %s23 = sphi 0, %s20
    %s24 = sphi 0, %s21
    %s25 = sphi 0, %s22
    %s43 = sphi 0, %s45
    %s46 = sphi 0, %s43
    %s47 = sphi 0, %s46
    %s63 = sphi 0, %s47
    %s73 = sphi 0, %s75
    %s76 = sphi 0, %s73
    %s77 = sphi 0, %s76
    %s93 = sphi 0, %s77
    %s101 = sphi 0, %s103
    %s104 = sphi 0, %s101
    %s105 = sphi 0, %s104
    %s121 = sphi 0, %s105
    %s129 = sphi 0, %s131
    %s132 = sphi 0, %s129
    %s133 = sphi 0, %s132
    %s149 = sphi 0, %s133
  $region4: #{dice_loss.1} parent=0 // loop_header_branch
    %13 = sbr.rel (%p11) target = $region8
  $region5: #{dice_loss.1} parent=0 // loop_body
    %s15 = ssub.s32 %s10, 1
    %s16 = ssub.s32 %s10, 2
    %s26 = sadd.s32 1, %s19
    %p27 = scmp.ge.s32.totalorder %s26, 1
    %s28 = scalar_select %p27, 0, %s26
    %s29 = sadd.s32 1, %s18
    %s30 = scalar_select %p27, %s29, %s18
    %p31 = scmp.ge.s32.totalorder %s30, 1
    %s32 = scalar_select %p31, 0, %s30
    %s33 = sadd.s32 1, %s17
    %s34 = scalar_select %p31, %s33, %s17
    %p35 = scmp.ge.s32.totalorder %s34, 2
    %s36 = scalar_select %p35, 0, %s34
    %s37 = sadd.s32 %s18, %s19
    %s38 = sadd.s32 %s32, %s28
    %s39 = ssub.s32 %s17, %s36
    %s40 = ssub.s32 %s37, %s38
    %s41 = sor.u32 %s39, %s40
    %p42 = scmp.eq.s32.totalorder %s41, 0
    %s44 = sadd.s32 %s43, 1
    %s45 = scalar_select %p42, %s43, %s44
    %p48 = pneg %p42
    %p49 = scmp.eq.s32.totalorder %s10, 1
    %p50 = por %p48, %p49
    %p51 = scmp.ne.s32.totalorder %s43, %s46
    %p52 = scmp.eq.s32.totalorder %s10, 0
    %p53 = por %p51, %p52
    %p54 = scmp.ne.s32.totalorder %s43, %s46
    %p55 = scmp.eq.s32.totalorder %s15, 1
    %p56 = por %p54, %p55
    %p57 = scmp.ne.s32.totalorder %s46, %s47
    %p58 = scmp.eq.s32.totalorder %s15, 0
    %p59 = por %p57, %p58
    %p60 = scmp.ne.s32.totalorder %s46, %s47
    %p61 = scmp.eq.s32.totalorder %s16, 1
    %p62 = por %p60, %p61
    %p64 = scmp.ne.s32.totalorder %s47, %s63
    %p65 = scmp.eq.s32.totalorder %s16, 0
    %p66 = por %p64, %p65
    %s67 = sadd.s32 %s18, %s19
    %s68 = sadd.s32 %s32, %s28
    %s69 = ssub.s32 %s17, %s36
    %s70 = ssub.s32 %s67, %s68
    %s71 = sor.u32 %s69, %s70
    %p72 = scmp.eq.s32.totalorder %s71, 0
    %s74 = sadd.s32 %s73, 1
    %s75 = scalar_select %p72, %s73, %s74
    %p78 = pneg %p72
    %p79 = scmp.eq.s32.totalorder %s10, 1
    %p80 = por %p78, %p79
    %p81 = scmp.ne.s32.totalorder %s73, %s76
    %p82 = scmp.eq.s32.totalorder %s10, 0
    %p83 = por %p81, %p82
    %p84 = scmp.ne.s32.totalorder %s73, %s76
    %p85 = scmp.eq.s32.totalorder %s15, 1
    %p86 = por %p84, %p85
    %p87 = scmp.ne.s32.totalorder %s76, %s77
    %p88 = scmp.eq.s32.totalorder %s15, 0
    %p89 = por %p87, %p88
    %p90 = scmp.ne.s32.totalorder %s76, %s77
    %p91 = scmp.eq.s32.totalorder %s16, 1
    %p92 = por %p90, %p91
    %p94 = scmp.ne.s32.totalorder %s77, %s93
    %p95 = scmp.eq.s32.totalorder %s16, 0
    %p96 = por %p94, %p95
    %s97 = ssub.s32 %s17, %s36
    %s98 = ssub.s32 %s18, %s32
    %s99 = sor.u32 %s97, %s98
    %p100 = scmp.eq.s32.totalorder %s99, 0
    %s102 = sadd.s32 %s101, 1
    %s103 = scalar_select %p100, %s101, %s102
    %p106 = pneg %p100
    %p107 = scmp.eq.s32.totalorder %s10, 1
    %p108 = por %p106, %p107
    %p109 = scmp.ne.s32.totalorder %s101, %s104
    %p110 = scmp.eq.s32.totalorder %s10, 0
    %p111 = por %p109, %p110
    %p112 = scmp.ne.s32.totalorder %s101, %s104
    %p113 = scmp.eq.s32.totalorder %s15, 1
    %p114 = por %p112, %p113
    %p115 = scmp.ne.s32.totalorder %s104, %s105
    %p116 = scmp.eq.s32.totalorder %s15, 0
    %p117 = por %p115, %p116
    %p118 = scmp.ne.s32.totalorder %s104, %s105
    %p119 = scmp.eq.s32.totalorder %s16, 1
    %p120 = por %p118, %p119
    %p122 = scmp.ne.s32.totalorder %s105, %s121
    %p123 = scmp.eq.s32.totalorder %s16, 0
    %p124 = por %p122, %p123
    %s125 = ssub.s32 %s17, %s36
    %s126 = ssub.s32 %s18, %s32
    %s127 = sor.u32 %s125, %s126
    %p128 = scmp.eq.s32.totalorder %s127, 0
    %s130 = sadd.s32 %s129, 1
    %s131 = scalar_select %p128, %s129, %s130
    %p134 = pneg %p128
    %p135 = scmp.eq.s32.totalorder %s10, 1
    %p136 = por %p134, %p135
    %p137 = scmp.ne.s32.totalorder %s129, %s132
    %p138 = scmp.eq.s32.totalorder %s10, 0
    %p139 = por %p137, %p138
    %p140 = scmp.ne.s32.totalorder %s129, %s132
    %p141 = scmp.eq.s32.totalorder %s15, 1
    %p142 = por %p140, %p141
    %p143 = scmp.ne.s32.totalorder %s132, %s133
    %p144 = scmp.eq.s32.totalorder %s15, 0
    %p145 = por %p143, %p144
    %p146 = scmp.ne.s32.totalorder %s132, %s133
    %p147 = scmp.eq.s32.totalorder %s16, 1
    %p148 = por %p146, %p147
    %p150 = scmp.ne.s32.totalorder %s133, %s149
    %p151 = scmp.eq.s32.totalorder %s16, 0
    %p152 = por %p150, %p151
    %p153 = scmp.le.s32.totalorder 1, %s10
    %p154 = scmp.lt.s32.totalorder %s10, 3
    %p155 = pnand %p153, %p154
    %p156 = pneg %p155
    // Predicated region
    $region9: #{dice_loss.1} parent=5 // pred_check
      _
    $region10: #{dice_loss.1} parent=5 // pred_check_branch
      %158 = sbr.rel (%p155) target = $region12
    $region11: #{dice_loss.1} parent=5 // pred_region
      %s159 = ssub.s32 %s10, 1
    $region12: #{dice_loss.1} parent=5 // pred_fallthru
      _
    %p160 = scmp.lt.s32.totalorder %s10, 2
    // Predicated region
    $region13: #{dice_loss.1} parent=5 // pred_check
      %p161 = pneg %p160
    $region14: #{dice_loss.1} parent=5 // pred_check_branch
      %163 = sbr.rel (%p161) target = $region16
    $region15: #{dice_loss.1} parent=5 // pred_region
      // Predicated region
      $region17: #{dice_loss.1} parent=15 // pred_check
        %p164 = pneg %p53
      $region18: #{dice_loss.1} parent=15 // pred_check_branch
        %166 = sbr.rel (%p164) target = $region20
      $region19: #{dice_loss.1} parent=15 // pred_region
        %s167 = sadd.s32 %s18, %s19
        %p168 = scmp.lt.s32.totalorder %s17, 1
        %s169 = scalar_select %p168, %s17, 1
        %p170 = scmp.lt.s32.totalorder %s167, 0
        %s171 = scalar_select %p170, %s167, 0
        %s172 = smul.addr %s169, 4
        %s173 = sadd.s32 %s171, %s172
        %s174 = smul.addr %s173, 2
        %s175 = scalar_lea.vmem %s0, %s174
        %s176 = sadd.s32 %s18, %s19
      $region20: #{dice_loss.1} parent=15 // pred_fallthru
        _
      // Predicated region
      $region21: #{dice_loss.1} parent=15 // pred_check
        %p177 = pneg %p83
      $region22: #{dice_loss.1} parent=15 // pred_check_branch
        %179 = sbr.rel (%p177) target = $region24
      $region23: #{dice_loss.1} parent=15 // pred_region
        %s180 = sadd.s32 %s18, %s19
        %p181 = scmp.lt.s32.totalorder %s17, 1
        %s182 = scalar_select %p181, %s17, 1
        %p183 = scmp.lt.s32.totalorder %s180, 0
        %s184 = scalar_select %p183, %s180, 0
        %s185 = sadd.s32 %s184, %s182
        %s186 = smul.addr %s185, 2
        %s187 = scalar_lea.vmem %s1, %s186
        %s188 = sadd.s32 %s18, %s19
      $region24: #{dice_loss.1} parent=15 // pred_fallthru
        _
    $region16: #{dice_loss.1} parent=5 // pred_fallthru
      _
    %p189 = scmp.le.s32.totalorder 1, %s10
    %p190 = scmp.lt.s32.totalorder %s10, 3
    %p191 = pnand %p189, %p190
    %p192 = pneg %p191
    // Predicated region
    $region25: #{dice_loss.1} parent=5 // pred_check
      _
    $region26: #{dice_loss.1} parent=5 // pred_check_branch
      %194 = sbr.rel (%p191) target = $region28
    $region27: #{dice_loss.1} parent=5 // pred_region
      %s195 = ssub.s32 %s10, 1
      %s196 = sadd.s32 %s21, %s22
      %p197 = scmp.lt.s32.totalorder %s20, 1
      %s198 = scalar_select %p197, %s20, 1
      %p199 = scmp.lt.s32.totalorder %s196, 0
      %s200 = scalar_select %p199, %s196, 0
      %s201 = smul.addr %s198, 4
      %s202 = sadd.s32 %s200, %s201
      %s203 = smul.addr %s202, 2
      %s204 = scalar_lea.vmem %s0, %s203
      %p205 = pneg %p59
      %p206 = pneg %p56
      %s207 = sadd.s32 %s21, %s22
      %p208 = scmp.lt.s32.totalorder %s20, 1
      %s209 = scalar_select %p208, %s20, 1
      %p210 = scmp.lt.s32.totalorder %s207, 0
      %s211 = scalar_select %p210, %s207, 0
      %s212 = sadd.s32 %s211, %s209
      %s213 = smul.addr %s212, 2
      %s214 = scalar_lea.vmem %s1, %s213
      %p215 = pneg %p89
      %p216 = pneg %p86
      %p217 = pneg %p117
      %p218 = pneg %p114
      %p219 = scmp.lt.s32.totalorder %s20, 1
      %s220 = scalar_select %p219, %s20, 1
      %p221 = scmp.lt.s32.totalorder %s21, 0
      %s222 = scalar_select %p221, %s21, 0
      %s223 = smul.addr %s222, 4
      %s224 = smul.addr %s220, 4
      %s225 = sadd.s32 %s223, %s224
      %s226 = smul.addr %s225, 2
      %s227 = scalar_lea.vmem %s2, %s226
      %p228 = pneg %p145
      %p229 = pneg %p142
      %p230 = scmp.lt.s32.totalorder %s20, 1
      %s231 = scalar_select %p230, %s20, 1
      %p232 = scmp.lt.s32.totalorder %s21, 0
      %s233 = scalar_select %p232, %s21, 0
      %s234 = smul.addr %s233, 4
      %s235 = smul.addr %s231, 4
      %s236 = sadd.s32 %s234, %s235
      %s237 = smul.addr %s236, 2
      %s238 = scalar_lea.vmem %s3, %s237
      %s239 = sadd.s32 %s21, %s22
      %p240 = scmp.lt.s32.totalorder %s20, 1
      %s241 = scalar_select %p240, %s20, 1
      %p242 = scmp.lt.s32.totalorder %s239, 0
      %s243 = scalar_select %p242, %s239, 0
      %s244 = smul.addr %s241, 4
      %s245 = sadd.s32 %s243, %s244
      %s246 = smul.addr %s245, 2
      %s247 = scalar_lea.vmem %s0, %s246
      %s248 = sadd.s32 %s21, %s22
      %s249 = sadd.s32 %s21, %s22
      %p250 = scmp.lt.s32.totalorder %s20, 1
      %s251 = scalar_select %p250, %s20, 1
      %p252 = scmp.lt.s32.totalorder %s249, 0
      %s253 = scalar_select %p252, %s249, 0
      %s254 = sadd.s32 %s253, %s251
      %s255 = smul.addr %s254, 2
      %s256 = scalar_lea.vmem %s1, %s255
      %s257 = sadd.s32 %s21, %s22
      %p258 = scmp.lt.s32.totalorder %s20, 1
      %s259 = scalar_select %p258, %s20, 1
      %p260 = scmp.lt.s32.totalorder %s21, 0
      %s261 = scalar_select %p260, %s21, 0
      %s262 = smul.addr %s261, 4
      %s263 = smul.addr %s259, 4
      %s264 = sadd.s32 %s262, %s263
      %s265 = smul.addr %s264, 2
      %s266 = scalar_lea.vmem %s2, %s265
      %p267 = scmp.lt.s32.totalorder %s20, 1
      %s268 = scalar_select %p267, %s20, 1
      %p269 = scmp.lt.s32.totalorder %s21, 0
      %s270 = scalar_select %p269, %s21, 0
      %s271 = smul.addr %s270, 4
      %s272 = smul.addr %s268, 4
      %s273 = sadd.s32 %s271, %s272
      %s274 = smul.addr %s273, 2
      %s275 = scalar_lea.vmem %s3, %s274
      %p276 = scmp.eq.s32.totalorder %s22, 0
      // Predicated region
      $region29: #{dice_loss.1} parent=27 // pred_check
        %p277 = pneg %p276
      $region30: #{dice_loss.1} parent=27 // pred_check_branch
        %279 = sbr.rel (%p277) target = $region32
      $region31: #{dice_loss.1} parent=27 // pred_region
        %280 = vst [vmem:[%s266] sm:$0x3] 0.0
        %281 = vst [vmem:[%s266 + $0x2] sm:$0x3] 0.0
        %282 = vst [vmem:[%s266 + $0x4] sm:$0x3] 0.0
        %283 = vst [vmem:[%s266 + $0x6] sm:$0x3] 0.0
        %284 = vst [vmem:[%s275] sm:$0x3] 0.0
        %285 = vst [vmem:[%s275 + $0x2] sm:$0x3] 0.0
        %286 = vst [vmem:[%s275 + $0x4] sm:$0x3] 0.0
        %287 = vst [vmem:[%s275 + $0x6] sm:$0x3] 0.0
      $region32: #{dice_loss.1} parent=27 // pred_fallthru
        _
      %v288 = vld [vmem:[%s247] sm:$0x3]
      %v289 = vld [vmem:[%s247 + $0x2] sm:$0x3]
      %v290 = vld [vmem:[%s247 + $0x4] sm:$0x3]
      %v291 = vld [vmem:[%s247 + $0x6] sm:$0x3]
      %vm292 = vcmask 1041408
      %v293 = vsel %vm292, %v288, -inf
      %v294 = vsel %vm292, %v289, -inf
      %v295 = vsel %vm292, %v290, -inf
      %v296 = vsel %vm292, %v291, -inf
      %v297 = vmax.f32 %v293, %v294
      %v298 = vmax.f32 %v295, %v296
      %v299 = vmax.f32 %v297, %v298
      %v300 = vsub.f32 %v288, %v299
      %v301 = vsub.f32 %v289, %v299
      %v302 = vsub.f32 %v290, %v299
      %v303 = vsub.f32 %v291, %v299
      %v304 = vmul.f32 %v300, 1.442695
      %v305 = vpow.pop %v304
      %v306 = vmul.f32 %v301, 1.442695
      %v307 = vpow.pop %v306
      %v308 = vmul.f32 %v302, 1.442695
      %v309 = vpow.pop %v308
      %v310 = vmul.f32 %v303, 1.442695
      %v311 = vpow.pop %v310
      %v312 = vsel %vm292, %v305, 0.0
      %v313 = vsel %vm292, %v307, 0.0
      %v314 = vadd.f32 %v312, %v313
      %v315 = vsel %vm292, %v309, 0.0
      %v316 = vadd.f32 %v314, %v315
      %v317 = vsel %vm292, %v311, 0.0
      %v318 = vadd.f32 %v316, %v317
      %v319 = vrcp.pop %v318
      %v320 = vmul.f32 %v305, %v319
      %v321 = vmul.f32 %v307, %v319
      %v322 = vmul.f32 %v309, %v319
      %v323 = vmul.f32 %v311, %v319
      %v324 = vld [vmem:[%s256] sm:$0x3]
      %vm325 = vcmp.eq.s32.totalorder %v324, 0
      %vm326 = vcmp.eq.s32.totalorder %v324, 1
      %vm327 = vcmp.eq.s32.totalorder %v324, 2
      %vm328 = vcmp.eq.s32.totalorder %v324, 3
      %v329 = vsel %vm325, 1, 0
      %v330 = vsel %vm326, 1, 0
      %v331 = vsel %vm327, 1, 0
      %v332 = vsel %vm328, 1, 0
      %v333 = vcvt.s32.f32 %v329
      %v334 = vcvt.s32.f32 %v330
      %v335 = vcvt.s32.f32 %v331
      %v336 = vcvt.s32.f32 %v332
      %v337 = vld [vmem:[%s266] sm:$0x3]
      %v338 = vld [vmem:[%s266 + $0x2] sm:$0x3]
      %v339 = vld [vmem:[%s266 + $0x4] sm:$0x3]
      %v340 = vld [vmem:[%s266 + $0x6] sm:$0x3]
      %v341 = vsel %vm325, %v320, 0.0
      %v342 = vsel %vm326, %v321, 0.0
      %v343 = vsel %vm327, %v322, 0.0
      %v344 = vsel %vm328, %v323, 0.0
      %v345 = vadd.f32 %v341, 0.0
      %v346 = vadd.f32 %v342, 0.0
      %v347 = vadd.f32 %v343, 0.0
      %v348 = vadd.f32 %v344, 0.0
      %v349 = vadd.f32 %v337, %v345
      %v350 = vadd.f32 %v338, %v346
      %v351 = vadd.f32 %v339, %v347
      %v352 = vadd.f32 %v340, %v348
      %353 = vst [vmem:[%s266] sm:$0x3] %v349
      %354 = vst [vmem:[%s266 + $0x2] sm:$0x3] %v350
      %355 = vst [vmem:[%s266 + $0x4] sm:$0x3] %v351
      %356 = vst [vmem:[%s266 + $0x6] sm:$0x3] %v352
      %v357 = vld [vmem:[%s275] sm:$0x3]
      %v358 = vld [vmem:[%s275 + $0x2] sm:$0x3]
      %v359 = vld [vmem:[%s275 + $0x4] sm:$0x3]
      %v360 = vld [vmem:[%s275 + $0x6] sm:$0x3]
      %v361 = vadd.f32 %v320, %v333
      %v362 = vadd.f32 %v321, %v334
      %v363 = vadd.f32 %v322, %v335
      %v364 = vadd.f32 %v323, %v336
      %v365 = vadd.f32 %v361, 0.0
      %v366 = vadd.f32 %v362, 0.0
      %v367 = vadd.f32 %v363, 0.0
      %v368 = vadd.f32 %v364, 0.0
      %v369 = vadd.f32 %v357, %v365
      %v370 = vadd.f32 %v358, %v366
      %v371 = vadd.f32 %v359, %v367
      %v372 = vadd.f32 %v360, %v368
      %373 = vst [vmem:[%s275] sm:$0x3] %v369
      %374 = vst [vmem:[%s275 + $0x2] sm:$0x3] %v370
      %375 = vst [vmem:[%s275 + $0x4] sm:$0x3] %v371
      %376 = vst [vmem:[%s275 + $0x6] sm:$0x3] %v372
      %p377 = scmp.lt.s32.totalorder %s20, 1
      %s378 = scalar_select %p377, %s20, 1
      %p379 = scmp.lt.s32.totalorder %s21, 0
      %s380 = scalar_select %p379, %s21, 0
      %s381 = smul.addr %s380, 4
      %s382 = smul.addr %s378, 4
      %s383 = sadd.s32 %s381, %s382
      %s384 = smul.addr %s383, 2
      %s385 = scalar_lea.vmem %s2, %s384
      %p386 = scmp.lt.s32.totalorder %s20, 1
      %s387 = scalar_select %p386, %s20, 1
      %p388 = scmp.lt.s32.totalorder %s21, 0
      %s389 = scalar_select %p388, %s21, 0
      %s390 = smul.addr %s389, 4
      %s391 = smul.addr %s387, 4
      %s392 = sadd.s32 %s390, %s391
      %s393 = smul.addr %s392, 2
      %s394 = scalar_lea.vmem %s3, %s393
      // Predicated region
      $region33: #{dice_loss.1} parent=27 // pred_check
        %p395 = pneg %p114
      $region34: #{dice_loss.1} parent=27 // pred_check_branch
        %397 = sbr.rel (%p395) target = $region36
      $region35: #{dice_loss.1} parent=27 // pred_region
        _
      $region36: #{dice_loss.1} parent=27 // pred_fallthru
        _
      // Predicated region
      $region37: #{dice_loss.1} parent=27 // pred_check
        %p398 = pneg %p142
      $region38: #{dice_loss.1} parent=27 // pred_check_branch
        %400 = sbr.rel (%p398) target = $region40
      $region39: #{dice_loss.1} parent=27 // pred_region
        _
      $region40: #{dice_loss.1} parent=27 // pred_fallthru
        _
    $region28: #{dice_loss.1} parent=5 // pred_fallthru
      _
    %p401 = scmp.le.s32.totalorder 2, %s10
    // Predicated region
    $region41: #{dice_loss.1} parent=5 // pred_check
      %p402 = pneg %p401
    $region42: #{dice_loss.1} parent=5 // pred_check_branch
      %404 = sbr.rel (%p402) target = $region44
    $region43: #{dice_loss.1} parent=5 // pred_region
      %s405 = ssub.s32 %s10, 2
      // Predicated region
      $region45: #{dice_loss.1} parent=43 // pred_check
        %p406 = pneg %p120
      $region46: #{dice_loss.1} parent=43 // pred_check_branch
        %408 = sbr.rel (%p406) target = $region48
      $region47: #{dice_loss.1} parent=43 // pred_region
        %p409 = scmp.lt.s32.totalorder %s23, 1
        %s410 = scalar_select %p409, %s23, 1
        %p411 = scmp.lt.s32.totalorder %s24, 0
        %s412 = scalar_select %p411, %s24, 0
        %s413 = smul.addr %s412, 4
        %s414 = smul.addr %s410, 4
        %s415 = sadd.s32 %s413, %s414
        %s416 = smul.addr %s415, 2
        %s417 = scalar_lea.vmem %s2, %s416
      $region48: #{dice_loss.1} parent=43 // pred_fallthru
        _
      // Predicated region
      $region49: #{dice_loss.1} parent=43 // pred_check
        %p418 = pneg %p148
      $region50: #{dice_loss.1} parent=43 // pred_check_branch
        %420 = sbr.rel (%p418) target = $region52
      $region51: #{dice_loss.1} parent=43 // pred_region
        %p421 = scmp.lt.s32.totalorder %s23, 1
        %s422 = scalar_select %p421, %s23, 1
        %p423 = scmp.lt.s32.totalorder %s24, 0
        %s424 = scalar_select %p423, %s24, 0
        %s425 = smul.addr %s424, 4
        %s426 = smul.addr %s422, 4
        %s427 = sadd.s32 %s425, %s426
        %s428 = smul.addr %s427, 2
        %s429 = scalar_lea.vmem %s3, %s428
      $region52: #{dice_loss.1} parent=43 // pred_fallthru
        _
    $region44: #{dice_loss.1} parent=5 // pred_fallthru
      _
  $region6: #{dice_loss.1} parent=0 // loop_footer
    %s14 = sadd.s32 1, %s10
  $region7: #{dice_loss.1} parent=0 // loop_footer_branch
    %9 = sbr.rel target = $region3
  $region8: #{dice_loss.1} parent=0 // loop_exit
    _

</llo_original>
